<compile_context>
chip_gen: v7x
topology: tpu7x:2x2x1
jax: 0.10.0
libtpu: 0.0.40
codegen_flags: <defaults>
</compile_context>

<pallas_src>
import jax
import jax.numpy as jnp
from jax.experimental import pallas as pl
from jax.experimental.pallas import tpu as pltpu


def time_siren_kernel(xf_ref, w1f_ref, w2f_ref, b2f_ref, of_ref):
    # xf_ref : (TR, F)      float32   folded timesteps (F original rows per row)
    # w1f_ref: (F, F*E)     float32   block-diagonal lin1.weight^T (no bias)
    # w2f_ref: (F*E, F*E)   float32   block-diagonal lin2.weight^T
    # b2f_ref: (1, F*E)     float32   lin2.bias tiled F times
    # of_ref : (TR, F*E)    float32   folded output (lane-dense when E | 128)
    xf = xf_ref[...]
    w1f = w1f_ref[...]
    fold = xf.shape[1]

    # --- Layer 1 on the VPU: per-fold-slot broadcast multiply (no K=1 MXU dot).
    # w1f rows have disjoint lane support, so summing the FOLD rank-1 products
    # fills each lane group with exactly its own x * w1 value.
    z = xf[:, 0:1] * w1f[0:1, :]
    for j in range(1, fold):                 # static unroll, fold <= 4
        z = z + xf[:, j:j + 1] * w1f[j:j + 1, :]
    # NOTE(v7x): sin is a multi-op VPU polynomial (not EUP); kept to exactly
    # one f32 sin per element to stay as close to the VALU floor as possible.
    h = jnp.sin(z)

    # --- Layer 2 on the MXU: contraction and lane dims are full (F*E wide).
    y = jnp.dot(h, w2f_ref[...], preferred_element_type=jnp.float32)
    y = y + b2f_ref[...]
    of_ref[...] = y.astype(of_ref.dtype)


def _as_f32(a):
    a = jnp.asarray(a)
    return a if a.dtype == jnp.float32 else a.astype(jnp.float32)


def fold_time_siren_params(w1, w2, b2):
    """Precompute folded (block-diagonal) parameters.

    Call ONCE per parameter set and reuse the result across steps: this hoists
    the per-call jnp.eye/kron/tile work (extra XLA launches + HBM round trips)
    out of the latency-critical path.

    w1: (1, E)  lin1.weight^T (bias=False)
    w2: (E, E)  lin2.weight^T
    b2: (E,)    lin2.bias
    """
    w1 = _as_f32(w1).reshape(1, -1)
    w2 = _as_f32(w2)
    b2 = _as_f32(b2).reshape(-1)
    e = w1.shape[1]

    # Fold rows into lanes so the kernel's output last dim is a multiple of
    # 128 (lane-dense stores).  Falls back to fold=1 (correct but lane-sparse
    # masked stores) if E does not divide 128.
    fold = 128 // e if (e < 128 and 128 % e == 0) else 1

    eye = jnp.eye(fold, dtype=jnp.float32)
    w1f = jnp.kron(eye, w1)                         # (fold, fold*E) block-diag
    w2f = jnp.kron(eye, w2)                         # (fold*E, fold*E) block-diag
    b2f = jnp.tile(b2.reshape(1, e), (1, fold))     # (1, fold*E)
    return {"w1f": w1f, "w2f": w2f, "b2f": b2f, "emb_dim": e, "fold": fold}


def time_siren_folded(x, params, *, max_tile_n=8192, out_dtype=jnp.float32):
    """sin(x.view(-1,1) @ w1) @ w2 + b2 using pre-folded params -> (N, E).

    max_tile_n defaults to 8192 rows (~1 MiB output blocks): amortizes the
    ~0.35 us per-grid-step overhead while staying within v5e's 16 MiB scoped
    VMEM default even with the lane-padded x block (see module docstring).
    out_dtype can be set to bf16 by callers that accept it (halves the
    dominant HBM write stream); default float32 matches the PyTorch module.
    """
    e = params["emb_dim"]
    fold = params["fold"]
    ef = fold * e
    w1f, w2f, b2f = params["w1f"], params["w2f"], params["b2f"]

    x1 = _as_f32(x).reshape(-1)
    n = x1.shape[0]

    # Row alignment: folded block sublane dim must be a multiple of 8, so row
    # counts are aligned to 8 * fold.
    row_align = 8 * fold
    n_rounded = pl.cdiv(n, row_align) * row_align

    # Number of grid blocks: big tiles to amortize per-step overhead, but
    # split into >=2 blocks when each block still carries >= ~1 MiB of output
    # so v7x's two TensorCores both get work (harmless on v5e/v6e).
    num_blocks = pl.cdiv(n_rounded, max_tile_n)
    min_split_tile_n = max(row_align, pl.cdiv(1 << 20, 4 * e))   # ~1 MiB out/block
    if num_blocks == 1 and n_rounded >= 2 * min_split_tile_n:
        num_blocks = 2

    # Tile size derived from the actual row count -> padded work is bounded by
    # ~num_blocks*row_align rows instead of up to a whole tile.
    tile_n = pl.cdiv(pl.cdiv(n_rounded, num_blocks), row_align) * row_align
    n_pad = num_blocks * tile_n

    if n_pad != n:
        x1 = jnp.pad(x1, (0, n_pad - n))      # padded rows sliced off at the end
    xf = x1.reshape(n_pad // fold, fold)      # free row-major relabel

    tile_rows = tile_n // fold
    grid = (num_blocks,)

    out_f = pl.pallas_call(
        time_siren_kernel,
        out_shape=jax.ShapeDtypeStruct((n_pad // fold, ef), out_dtype),
        grid=grid,
        in_specs=[
            # x tiles: double-buffered.  NOTE: the (tile_rows, fold) block is
            # lane-padded to 128 lanes in VMEM (~tile_rows*512 B per buffer);
            # this inflation is accepted and accounted for in the default
            # max_tile_n budget above.
            pl.BlockSpec((tile_rows, fold), lambda i: (i, 0)),
            # Constant-index weights/bias: DMA'd once, single-buffered.
            pl.BlockSpec((fold, ef), lambda i: (0, 0),
                         pipeline_mode=pl.Buffered(1)),
            pl.BlockSpec((ef, ef), lambda i: (0, 0),
                         pipeline_mode=pl.Buffered(1)),
            pl.BlockSpec((1, ef), lambda i: (0, 0),
                         pipeline_mode=pl.Buffered(1)),
        ],
        out_specs=pl.BlockSpec((tile_rows, ef), lambda i: (i, 0)),
        compiler_params=pltpu.CompilerParams(
            dimension_semantics=("parallel",)),
    )(xf, w1f, w2f, b2f)

    out = out_f.reshape(n_pad, e)             # free row-major relabel (un-fold)
    return out[:n] if n_pad != n else out


def time_siren(x, w1, w2, b2, *, max_tile_n=8192, out_dtype=jnp.float32):
    """Convenience wrapper (folds params on every call).

    For hot training/inference loops, call fold_time_siren_params() once and
    use time_siren_folded() instead.
    """
    params = fold_time_siren_params(w1, w2, b2)
    return time_siren_folded(x, params, max_tile_n=max_tile_n,
                             out_dtype=out_dtype)


if __name__ == "__main__":
    emb_dim = 32
    n = 8  # a small batch of scalar timesteps

    key = jax.random.PRNGKey(0)
    kx, k1, k2, kb = jax.random.split(key, 4)

    # Synthetic params (shapes match nn.Linear; stored transposed: y = x @ W + b).
    w1 = jax.random.normal(k1, (1, emb_dim), dtype=jnp.float32) * 0.5
    w2 = jax.random.normal(k2, (emb_dim, emb_dim), dtype=jnp.float32) / jnp.sqrt(emb_dim)
    b2 = jax.random.normal(kb, (emb_dim,), dtype=jnp.float32) * 0.1

    x = jax.random.uniform(kx, (n,), dtype=jnp.float32)

    # Fold once (hoisted out of the hot path), reuse for every call.
    params = fold_time_siren_params(w1, w2, b2)

    out = jax.block_until_ready(time_siren_folded(x, params))

    # Pure-JAX reference check (small case, single block).
    x2 = x.reshape(-1, 1)
    ref = jnp.sin(x2 @ w1) @ w2 + b2[None, :]
    assert out.shape == (n, emb_dim)
    assert jnp.allclose(out, ref, atol=1e-5, rtol=1e-5), "mismatch vs reference (small)"

    # Second check: multi-block grid + bounded-padding path (3 blocks of 128).
    n2 = 300
    x_big = jax.random.uniform(jax.random.PRNGKey(1), (n2,), dtype=jnp.float32)
    out_big = jax.block_until_ready(
        time_siren_folded(x_big, params, max_tile_n=128))
    ref_big = jnp.sin(x_big.reshape(-1, 1) @ w1) @ w2 + b2[None, :]
    assert out_big.shape == (n2, emb_dim)
    assert jnp.allclose(out_big, ref_big, atol=1e-5, rtol=1e-5), "mismatch vs reference (tiled)"

    print("KERNEL_OK")
</pallas_src>

<mosaic_0001>
module attributes {stable_mosaic.version = 11 : i64} {
  func.func @time_siren_kernel(%arg0: i32, %arg1: memref<8x4xf32, #tpu.memory_space<vmem>>, %arg2: memref<4x128xf32, #tpu.memory_space<vmem>>, %arg3: memref<128x128xf32, #tpu.memory_space<vmem>>, %arg4: memref<1x128xf32, #tpu.memory_space<vmem>>, %arg5: memref<8x128xf32, #tpu.memory_space<vmem>>) attributes {dimension_semantics = [#tpu.dimension_semantics<parallel>], iteration_bounds = array<i64: 1>, scalar_prefetch = 0 : i64, scratch_operands = 0 : i64, tpu.core_type = #tpu.core_type<tc>, window_params = [{transform_indices = @transform_0, window_bounds = array<i64: 8, 4>}, {pipeline_mode = #tpu.pipeline_mode<synchronous>, transform_indices = @transform_1, window_bounds = array<i64: 4, 128>}, {pipeline_mode = #tpu.pipeline_mode<synchronous>, transform_indices = @transform_2, window_bounds = array<i64: 128, 128>}, {pipeline_mode = #tpu.pipeline_mode<synchronous>, transform_indices = @transform_3, window_bounds = array<i64: 1, 128>}, {transform_indices = @transform_4, window_bounds = array<i64: 8, 128>}]} {
    %c0 = arith.constant 0 : index
    %c0_0 = arith.constant 0 : index
    %0 = vector.load %arg1[%c0, %c0_0] : memref<8x4xf32, #tpu.memory_space<vmem>>, vector<8x4xf32>
    %c0_1 = arith.constant 0 : index
    %c0_2 = arith.constant 0 : index
    %1 = vector.load %arg2[%c0_1, %c0_2] : memref<4x128xf32, #tpu.memory_space<vmem>>, vector<4x128xf32>
    %2 = vector.extract_strided_slice %0 {offsets = [0, 0], sizes = [8, 1], strides = [1, 1]} : vector<8x4xf32> to vector<8x1xf32>
    %3 = vector.extract_strided_slice %1 {offsets = [0, 0], sizes = [1, 128], strides = [1, 1]} : vector<4x128xf32> to vector<1x128xf32>
    %4 = vector.broadcast %2 : vector<8x1xf32> to vector<8x128xf32>
    %5 = vector.broadcast %3 : vector<1x128xf32> to vector<8x128xf32>
    %6 = arith.mulf %4, %5 : vector<8x128xf32>
    %7 = vector.extract_strided_slice %0 {offsets = [0, 1], sizes = [8, 1], strides = [1, 1]} : vector<8x4xf32> to vector<8x1xf32>
    %8 = vector.extract_strided_slice %1 {offsets = [1, 0], sizes = [1, 128], strides = [1, 1]} : vector<4x128xf32> to vector<1x128xf32>
    %9 = vector.broadcast %7 : vector<8x1xf32> to vector<8x128xf32>
    %10 = vector.broadcast %8 : vector<1x128xf32> to vector<8x128xf32>
    %11 = arith.mulf %9, %10 : vector<8x128xf32>
    %12 = arith.addf %6, %11 : vector<8x128xf32>
    %13 = vector.extract_strided_slice %0 {offsets = [0, 2], sizes = [8, 1], strides = [1, 1]} : vector<8x4xf32> to vector<8x1xf32>
    %14 = vector.extract_strided_slice %1 {offsets = [2, 0], sizes = [1, 128], strides = [1, 1]} : vector<4x128xf32> to vector<1x128xf32>
    %15 = vector.broadcast %13 : vector<8x1xf32> to vector<8x128xf32>
    %16 = vector.broadcast %14 : vector<1x128xf32> to vector<8x128xf32>
    %17 = arith.mulf %15, %16 : vector<8x128xf32>
    %18 = arith.addf %12, %17 : vector<8x128xf32>
    %19 = vector.extract_strided_slice %0 {offsets = [0, 3], sizes = [8, 1], strides = [1, 1]} : vector<8x4xf32> to vector<8x1xf32>
    %20 = vector.extract_strided_slice %1 {offsets = [3, 0], sizes = [1, 128], strides = [1, 1]} : vector<4x128xf32> to vector<1x128xf32>
    %21 = vector.broadcast %19 : vector<8x1xf32> to vector<8x128xf32>
    %22 = vector.broadcast %20 : vector<1x128xf32> to vector<8x128xf32>
    %23 = arith.mulf %21, %22 : vector<8x128xf32>
    %24 = arith.addf %18, %23 : vector<8x128xf32>
    %25 = math.sin %24 : vector<8x128xf32>
    %c0_3 = arith.constant 0 : index
    %c0_4 = arith.constant 0 : index
    %26 = vector.load %arg3[%c0_3, %c0_4] : memref<128x128xf32, #tpu.memory_space<vmem>>, vector<128x128xf32>
    %cst = arith.constant dense<0.000000e+00> : vector<8x128xf32>
    %27 = tpu.matmul %25, %26, %cst {dimension_numbers = #tpu.dot_dimension_numbers<[1], [0], [0], [1], [0, 0, 1, 1], [], []>} : vector<8x128xf32>, vector<128x128xf32>, vector<8x128xf32> -> vector<8x128xf32>
    %c0_5 = arith.constant 0 : index
    %c0_6 = arith.constant 0 : index
    %28 = vector.load %arg4[%c0_5, %c0_6] : memref<1x128xf32, #tpu.memory_space<vmem>>, vector<1x128xf32>
    %29 = vector.broadcast %28 : vector<1x128xf32> to vector<8x128xf32>
    %30 = arith.addf %27, %29 : vector<8x128xf32>
    %c0_7 = arith.constant 0 : index
    %c0_8 = arith.constant 0 : index
    %31 = vector.load %arg5[%c0_7, %c0_8] : memref<8x128xf32, #tpu.memory_space<vmem>>, vector<8x128xf32>
    tpu.vector_store %arg5[%c0_7, %c0_8], %30 {strides = array<i32>} : memref<8x128xf32, #tpu.memory_space<vmem>>, vector<8x128xf32>,
    return
  }
  func.func @transform_0(%arg0: i32) -> (i32, i32) {
    %c0_i32 = arith.constant 0 : i32
    %c0_i32_0 = arith.constant 0 : i32
    return %arg0, %c0_i32 : i32, i32
  }
  func.func @transform_1(%arg0: i32) -> (i32, i32) {
    %c0_i32 = arith.constant 0 : i32
    %c0_i32_0 = arith.constant 0 : i32
    %c0_i32_1 = arith.constant 0 : i32
    return %c0_i32, %c0_i32_0 : i32, i32
  }
  func.func @transform_2(%arg0: i32) -> (i32, i32) {
    %c0_i32 = arith.constant 0 : i32
    %c0_i32_0 = arith.constant 0 : i32
    %c0_i32_1 = arith.constant 0 : i32
    return %c0_i32, %c0_i32_0 : i32, i32
  }
  func.func @transform_3(%arg0: i32) -> (i32, i32) {
    %c0_i32 = arith.constant 0 : i32
    %c0_i32_0 = arith.constant 0 : i32
    %c0_i32_1 = arith.constant 0 : i32
    return %c0_i32, %c0_i32_0 : i32, i32
  }
  func.func @transform_4(%arg0: i32) -> (i32, i32) {
    %c0_i32 = arith.constant 0 : i32
    %c0_i32_0 = arith.constant 0 : i32
    return %arg0, %c0_i32 : i32, i32
  }
}

</mosaic_0001>

<llo_original>
// kernel: tpu_custom_call.1
$region0: #{tpu_custom_call.1}
  #allocation0 [shape = 'u32[]', space=smem, size = 0x4, offset = 0x4, fixed_abs, tag = 'smem constant byte address 0x4 - core index']
  #allocation1 [shape = 'u32[144,128]{1,0:T(1,128)}', space=vmem, size = 0x12000, scoped, tag = 'internal scratch']
  %s0 = inlined_call_operand.vmem [shape: f32[8,4], index: 0, kind: input, shape index: {}]
  %s1 = inlined_call_operand.vmem [shape: f32[4,128], index: 1, kind: input, shape index: {}]
  %s2 = inlined_call_operand.hbm [shape: f32[128,128], index: 2, kind: input, shape index: {}]
  %s3 = inlined_call_operand.vmem [shape: f32[1,128], index: 3, kind: input, shape index: {}]
  %s4 = inlined_call_operand.hbm [shape: f32[8,128], index: 4, kind: output, shape index: {}]
  %s5 = sld [smem:[#allocation0]]
  $region30: #{tpu_custom_call.1} parent=0
    _
  %s7 = ssub.s32 1, %s5
  %s8 = scalar_select 0, %s7, %s5
  $region1: #{tpu_custom_call.1} parent=0
    #allocation2 [shape = 'u8[65536]{0}', space=vmem, size = 0x10000, scoped, tag = 'input window, operand 2, single buffered']
    #allocation3 [shape = 's32[1]{0}', space=sflag, size = 0x4, scoped, tag = 'scoped memory for tpu_custom_call.1']
    #allocation4 [shape = 's32[1]{0}', space=sflag, size = 0x4, scoped, tag = 'scoped memory for tpu_custom_call.1']
    #allocation5 [shape = 'u8[4096]{0}', space=vmem, size = 0x1000, scoped, tag = 'output window, operand 0, single buffered']
    %9 = vsyncpa [#allocation3], 0
    %10 = vsyncpa [#allocation4], 0
    // Predicated region
    $region2: #{tpu_custom_call.1} parent=1 // pred_check
      _
    $region3: #{tpu_custom_call.1} parent=1 // pred_check_branch
      %12 = sbr.rel (0) target = $region5
    $region4: #{tpu_custom_call.1} parent=1 // pred_region
      _
    $region5: #{tpu_custom_call.1} parent=1 // pred_fallthru
      _
    // Predicated region
    $region6: #{tpu_custom_call.1} parent=1 // pred_check
      _
    $region7: #{tpu_custom_call.1} parent=1 // pred_check_branch
      %14 = sbr.rel (0) target = $region9
    $region8: #{tpu_custom_call.1} parent=1 // pred_region
      _
    $region9: #{tpu_custom_call.1} parent=1 // pred_fallthru
      _
    // Predicated region
    $region10: #{tpu_custom_call.1} parent=1 // pred_check
      _
    $region11: #{tpu_custom_call.1} parent=1 // pred_check_branch
      %16 = sbr.rel (0) target = $region13
    $region12: #{tpu_custom_call.1} parent=1 // pred_region
      %s18 = ssub.s32 2048, 2048
      %19 = vsyncadd [#allocation3], %s18
      %s20 = sshll.u32 [#allocation2], 4
      %s21 = int_to_ptr.vmem [resolvable:$true] %s20
      %26 = dma.hbm_to_vmem [thread:$0]  %s2, 2048, %s21, [#allocation3], 128, 128, 8
    $region13: #{tpu_custom_call.1} parent=1 // pred_fallthru
      _
    // Predicated region
    $region14: #{tpu_custom_call.1} parent=1 // pred_check
      _
    $region15: #{tpu_custom_call.1} parent=1 // pred_check_branch
      %28 = sbr.rel (0) target = $region17
    $region16: #{tpu_custom_call.1} parent=1 // pred_region
      _
    $region17: #{tpu_custom_call.1} parent=1 // pred_fallthru
      _
    // Predicated region
    $region18: #{tpu_custom_call.1} parent=1 // pred_check
      _
    $region19: #{tpu_custom_call.1} parent=1 // pred_check_branch
      %30 = sbr.rel (0) target = $region21
    $region20: #{tpu_custom_call.1} parent=1 // pred_region
      %31 = dma.done [#allocation3], 2048
    $region21: #{tpu_custom_call.1} parent=1 // pred_fallthru
      _
    %v32 = vld [vmem:[%s0] sm:$0xff]
    %v33 = vld [vmem:[%s1] sm:$0xf]
    %35 = vset.pattern.permute.xlu0 0
    %36 = vperm.xlu0 %35, %v32
    %v37 = vpop.permute.xlu0 %36
    %v39 = vlaneseq
    %v40 = vshrl.u32 %v39, 7
    %v41 = vsub.s32 0, %v40
    %v42 = vrot.slane %v33, %v41
    %v43 = vmul.f32 %v37, %v42
    %44 = vset.pattern.permute.xlu0 1
    %45 = vperm.xlu0 %44, %v32
    %v46 = vpop.permute.xlu0 %45
    %v48 = vlaneseq
    %v49 = vshrl.u32 %v48, 7
    %v50 = vsub.s32 1, %v49
    %v51 = vrot.slane %v33, %v50
    %v52 = vmul.f32 %v46, %v51
    %v53 = vadd.f32 %v43, %v52
    %54 = vset.pattern.permute.xlu0 2
    %55 = vperm.xlu0 %54, %v32
    %v56 = vpop.permute.xlu0 %55
    %v58 = vlaneseq
    %v59 = vshrl.u32 %v58, 7
    %v60 = vsub.s32 2, %v59
    %v61 = vrot.slane %v33, %v60
    %v62 = vmul.f32 %v56, %v61
    %v63 = vadd.f32 %v53, %v62
    %64 = vset.pattern.permute.xlu0 3
    %65 = vperm.xlu0 %64, %v32
    %v66 = vpop.permute.xlu0 %65
    %v68 = vlaneseq
    %v69 = vshrl.u32 %v68, 7
    %v70 = vsub.s32 3, %v69
    %v71 = vrot.slane %v33, %v70
    %v72 = vmul.f32 %v66, %v71
    %v73 = vadd.f32 %v63, %v72
    %v74 = vand.u32 2147483647, %v73
    %vm75 = vcmp.le.f32.partialorder %v74, 0.7853982
    %vm76 = vcmp.lt.s32.totalorder %v73, 0
    %v77 = vand.u32 %v73, 2139095040
    %v78 = vshrl.u32 %v77, 23
    %v79 = vsub.s32 %v78, 127
    %v80 = vand.u32 2147483647, %v73
    %v81 = vand.u32 %v80, 8388607
    %v82 = vor.u32 %v81, 8388608
    %v83 = vsub.s32 0, %v82
    %v84 = vadd.s32 %v79, 1
    %vm85 = vcmp.gt.s32.totalorder %v84, 0
    %v86 = vsel %vm85, %v84, 0
    %v87 = vshrl.u32 %v86, 5
    %v88 = vand.u32 %v86, 31
    %v89 = vsub.s32 32, %v88
    %v90 = vshrl.u32 683565275, %v89
    %v91 = vshll.u32 683565275, %v88
    %v92 = vshrl.u32 2475754826, %v89
    %v93 = vor.u32 %v91, %v92
    %v94 = vshll.u32 2475754826, %v88
    %v95 = vshrl.u32 2131351028, %v89
    %v96 = vor.u32 %v94, %v95
    %v97 = vshll.u32 2131351028, %v88
    %v98 = vshrl.u32 2102212464, %v89
    %v99 = vor.u32 %v97, %v98
    %v100 = vshll.u32 2102212464, %v88
    %v101 = vshrl.u32 920167782, %v89
    %v102 = vor.u32 %v100, %v101
    %v103 = vshll.u32 920167782, %v88
    %v104 = vshrl.u32 1326507024, %v89
    %v105 = vor.u32 %v103, %v104
    %vm106 = vcmp.lt.s32.totalorder %v87, 1
    %vm107 = vcmp.lt.s32.totalorder %v87, 2
    %vm108 = vcmp.lt.s32.totalorder %v87, 3
    %vm109 = vcmp.lt.s32.totalorder %v87, 4
    %v110 = vsel %vm106, %v90, %v93
    %v111 = vsel %vm109, %v99, 2102212464
    %v112 = vsel %vm108, %v96, %v111
    %v113 = vsel %vm107, %v110, %v112
    %v114 = vsel %vm106, %v93, %v96
    %v115 = vsel %vm109, %v102, 920167782
    %v116 = vsel %vm108, %v99, %v115
    %v117 = vsel %vm107, %v114, %v116
    %v118 = vsel %vm106, %v96, %v99
    %v119 = vsel %vm109, %v105, 1326507024
    %v120 = vsel %vm108, %v102, %v119
    %v121 = vsel %vm107, %v118, %v120
    %v122 = vshll.u32 %v82, 8
    %v123 = vmul.u32.u64.compose %v122, %v121
    %v124 = vextract.low.u32 %v123
    %v125 = vextract.high.u32 %v123
    %v126 = vmul.u32.u64.compose %v122, %v117
    %v127 = vextract.low.u32 %v126
    %v128 = vextract.high.u32 %v126
    %v129 = vmul.u32 %v122, %v113
    %v130 = vadd.s32 %v125, %v127
    %vm131 = vc.u32 %v125, %v127
    %v132 = vadd.s32 %v128, 1
    %v133 = vsel %vm131, %v132, %v128
    %v134 = vadd.s32 %v129, %v133
    %v135 = vadd.s32 %v134, 536870912
    %v136 = vshrl.u32 %v135, 30
    %v137 = vshll.u32 %v136, 30
    %v138 = vsub.s32 %v134, %v137
    %vm139 = vcmp.lt.s32.totalorder %v138, 0
    %v140 = vsub.s32 0, %v138
    %v141 = vsel %vm139, %v140, %v138
    %v142 = vclz %v141
    %v143 = vsub.s32 %v142, 2
    %vm144 = vcmp.gt.s32.totalorder 0, %v143
    %v145 = vsel %vm144, 0, %v143
    %v146 = vsub.s32 32, %v145
    %v147 = vshll.u32 %v138, %v145
    %v148 = vshrl.u32 %v130, %v146
    %v149 = vor.u32 %v147, %v148
    %v150 = vsub.s32 4294967266, %v145
    %v151 = vadd.s32 %v150, 127
    %v152 = vshll.u32 %v151, 23
    %v153 = vor.u32 4788187, %v152
    %v154 = vand.u32 2147483647, %v153
    %v156 = vcvt.s32.f32 %v149
    %v157 = vmul.f32 %v156, %v154
    %v158 = vxor.u32 %v157, 2147483648
    %v159 = vsel %vm76, %v158, %v157
    %v160 = vsub.s32 4, %v136
    %v161 = vsel %vm76, %v160, %v136
    %v162 = vsel %vm75, %v73, %v159
    %v163 = vsel %vm75, 0, %v161
    %v164 = vcosq.f32.pop %v162
    %v165 = vsinq.f32.pop %v162
    %vm166 = vweird.f32 %v73
    %v167 = vadd.s32 %v163, 3
    %v168 = vand.u32 %v167, 3
    %vm169 = vcmp.lt.s32.totalorder %v168, 2
    %vm170 = vcmp.eq.s32.totalorder %v168, 0
    %v171 = vxor.u32 %v165, 2147483648
    %v172 = vsel %vm170, %v164, %v171
    %vm173 = vcmp.eq.s32.totalorder %v168, 2
    %v174 = vxor.u32 %v164, 2147483648
    %v175 = vsel %vm173, %v174, %v165
    %v176 = vsel %vm169, %v172, %v175
    %v177 = vsel %vm166, nan, %v176
    %v178 = vld [vmem:[#allocation2] sm:$0xff]
    %v179 = vld [vmem:[#allocation2 + $0x8] sm:$0xff]
    %v180 = vld [vmem:[#allocation2 + $0x10] sm:$0xff]
    %v181 = vld [vmem:[#allocation2 + $0x18] sm:$0xff]
    %v182 = vld [vmem:[#allocation2 + $0x20] sm:$0xff]
    %v183 = vld [vmem:[#allocation2 + $0x28] sm:$0xff]
    %v184 = vld [vmem:[#allocation2 + $0x30] sm:$0xff]
    %v185 = vld [vmem:[#allocation2 + $0x38] sm:$0xff]
    %v186 = vld [vmem:[#allocation2 + $0x40] sm:$0xff]
    %v187 = vld [vmem:[#allocation2 + $0x48] sm:$0xff]
    %v188 = vld [vmem:[#allocation2 + $0x50] sm:$0xff]
    %v189 = vld [vmem:[#allocation2 + $0x58] sm:$0xff]
    %v190 = vld [vmem:[#allocation2 + $0x60] sm:$0xff]
    %v191 = vld [vmem:[#allocation2 + $0x68] sm:$0xff]
    %v192 = vld [vmem:[#allocation2 + $0x70] sm:$0xff]
    %v193 = vld [vmem:[#allocation2 + $0x78] sm:$0xff]
    %v194 = vld [vmem:[%s3] sm:$0x1]
    %v196 = vlaneseq
    %v197 = vshrl.u32 %v196, 7
    %v198 = vsub.s32 0, %v197
    %v199 = vrot.slane %v194, %v198
    %201 = vmatprep.subr.mxu0 0.0
    %202 = vmatpush1.msra.mxu0 %v178
    %203 = vmatprep.subr.mxu0 0.0
    %204 = vmatpush1.msra.mxu0 %v179
    %205 = vmatprep.subr.mxu0 0.0
    %206 = vmatpush1.msra.mxu0 %v180
    %207 = vmatprep.subr.mxu0 0.0
    %208 = vmatpush1.msra.mxu0 %v181
    %209 = vmatprep.subr.mxu0 0.0
    %210 = vmatpush1.msra.mxu0 %v182
    %211 = vmatprep.subr.mxu0 0.0
    %212 = vmatpush1.msra.mxu0 %v183
    %213 = vmatprep.subr.mxu0 0.0
    %214 = vmatpush1.msra.mxu0 %v184
    %215 = vmatprep.subr.mxu0 0.0
    %216 = vmatpush1.msra.mxu0 %v185
    %217 = vmatprep.subr.mxu0 0.0
    %218 = vmatpush1.msra.mxu0 %v186
    %219 = vmatprep.subr.mxu0 0.0
    %220 = vmatpush1.msra.mxu0 %v187
    %221 = vmatprep.subr.mxu0 0.0
    %222 = vmatpush1.msra.mxu0 %v188
    %223 = vmatprep.subr.mxu0 0.0
    %224 = vmatpush1.msra.mxu0 %v189
    %225 = vmatprep.subr.mxu0 0.0
    %226 = vmatpush1.msra.mxu0 %v190
    %227 = vmatprep.subr.mxu0 0.0
    %228 = vmatpush1.msra.mxu0 %v191
    %229 = vmatprep.subr.mxu0 0.0
    %230 = vmatpush1.msra.mxu0 %v192
    %231 = vmatprep.subr.mxu0 0.0
    %232 = vmatpush1.msra.mxu0 %v193
    %233 = vmatprep.subr.mxu0 0.0
    %234 = vmatpush1.msra.mxu0 0.0
    %235 = vmatprep.subr.mxu0 0.0
    %236 = vmatpush1.msra.mxu0 0.0
    %237 = vmatprep.subr.mxu0 0.0
    %238 = vmatpush1.msra.mxu0 0.0
    %239 = vmatprep.subr.mxu0 0.0
    %240 = vmatpush1.msra.mxu0 0.0
    %241 = vmatprep.subr.mxu0 0.0
    %242 = vmatpush1.msra.mxu0 0.0
    %243 = vmatprep.subr.mxu0 0.0
    %244 = vmatpush1.msra.mxu0 0.0
    %245 = vmatprep.subr.mxu0 0.0
    %246 = vmatpush1.msra.mxu0 0.0
    %247 = vmatprep.subr.mxu0 0.0
    %248 = vmatpush1.msra.mxu0 0.0
    %249 = vmatprep.subr.mxu0 0.0
    %250 = vmatpush1.msra.mxu0 0.0
    %251 = vmatprep.subr.mxu0 0.0
    %252 = vmatpush1.msra.mxu0 0.0
    %253 = vmatprep.subr.mxu0 0.0
    %254 = vmatpush1.msra.mxu0 0.0
    %255 = vmatprep.subr.mxu0 0.0
    %256 = vmatpush1.msra.mxu0 0.0
    %257 = vmatprep.subr.mxu0 0.0
    %258 = vmatpush1.msra.mxu0 0.0
    %259 = vmatprep.subr.mxu0 0.0
    %260 = vmatpush1.msra.mxu0 0.0
    %261 = vmatprep.subr.mxu0 0.0
    %262 = vmatpush1.msra.mxu0 0.0
    %263 = vmatprep.subr.mxu0 0.0
    %264 = vmatpush1.msra.mxu0 0.0
    %265 = vmatprep.mubr.f32.mxu0 0.0
    %266 = vmatmul.mubr.f32.gmra.mrb[0].mxu0 %v177
    %v267 = vpop.f32.mrb[0].mxu0
    %v268 = vadd.f32 %v199, %v267
    %v269 = vpop.f32.mrb[0].mxu0
    %270 = vdwg.mxu0
    %271 = vst [vmem:[#allocation5] sm:$0xff] %v268
    // Predicated region
    $region22: #{tpu_custom_call.1} parent=1 // pred_check
      _
    $region23: #{tpu_custom_call.1} parent=1 // pred_check_branch
      %273 = sbr.rel (0) target = $region25
    $region24: #{tpu_custom_call.1} parent=1 // pred_region
      %s275 = ssub.s32 128, 128
      %276 = vsyncadd [#allocation4], %s275
      %s278 = sshll.u32 [#allocation5], 4
      %s279 = int_to_ptr.vmem [resolvable:$true] %s278
      %281 = dma.vmem_to_hbm [thread:$0]  %s279, 128, %s4, [#allocation4]
    $region25: #{tpu_custom_call.1} parent=1 // pred_fallthru
      _
    // Predicated region
    $region26: #{tpu_custom_call.1} parent=1 // pred_check
      _
    $region27: #{tpu_custom_call.1} parent=1 // pred_check_branch
      %283 = sbr.rel (0) target = $region29
    $region28: #{tpu_custom_call.1} parent=1 // pred_region
      %284 = dma.done [#allocation4], 128
    $region29: #{tpu_custom_call.1} parent=1 // pred_fallthru
      _
    %285 = vsyncpa [#allocation3], 1
    %286 = vsyncpa [#allocation4], 1

</llo_original>
